<compile_context>
chip_gen: v7x
topology: tpu7x:2x2x1
jax: 0.10.0
libtpu: 0.0.40
codegen_flags: <defaults>
</compile_context>

<pallas_src>
import jax
import jax.numpy as jnp
from jax.experimental import pallas as pl
from jax.experimental.pallas import tpu as pltpu

LEAKY_SLOPE = 0.2
BN_EPS = 1e-5

_VMEM_CAP_BYTES = 48 << 20      # compiler vmem limit cap (headroom under v7x's 64 MiB)
_VMEM_TILE_BUDGET = 40 << 20    # budget used when sizing the batch tile
_LANE = 128


def _round_up(x, m):
    return ((x + m - 1) // m) * m


def _round_down(x, m):
    return (x // m) * m


# ---------------------------------------------------------------------------
# Kernel
# ---------------------------------------------------------------------------
def _make_generator_kernel(n_mid, act_dtype):
    """Build the fused kernel for 1 input layer + n_mid middle layers + output layer."""

    def kernel(z_ref, w1_ref, wmid_ref, bhid_ref, w4_ref, b4_ref, o_ref):
        # Cast the input tile once to the weight dtype (no-op for f32 weights);
        # all matmuls accumulate in f32 on the MXU.
        x = z_ref[...].astype(w1_ref.dtype)

        def hidden(x, w, b):
            # Linear with eval-mode BatchNorm1d already folded into W/b.
            h = jnp.dot(x.astype(w.dtype), w, preferred_element_type=jnp.float32)
            h = h.astype(act_dtype) + b.astype(act_dtype)
            # LeakyReLU(0.2); Dropout(0.2) is identity in eval mode.
            return jnp.where(h > 0, h, LEAKY_SLOPE * h)

        x = hidden(x, w1_ref[...], bhid_ref[0])
        for l in range(n_mid):                      # static unroll
            x = hidden(x, wmid_ref[l], bhid_ref[l + 1])

        # Output Linear (f32 accumulate, f32 bias) + Tanh, lane-dense store.
        out = jnp.dot(x.astype(w4_ref.dtype), w4_ref[...],
                      preferred_element_type=jnp.float32) + b4_ref[...]
        o_ref[...] = jnp.tanh(out).astype(o_ref.dtype)

    return kernel


# ---------------------------------------------------------------------------
# Params
# ---------------------------------------------------------------------------
def init_params(key, noise_dim, hidden_dim, output_dim, num_layers=3):
    """Deterministic PyTorch-style init (uniform +/- 1/sqrt(fan_in)) + fresh BN stats."""
    params = []
    in_dim = noise_dim
    dims = [hidden_dim] * num_layers + [output_dim]
    for out_dim in dims:
        key, kw, kb = jax.random.split(key, 3)
        bound = 1.0 / jnp.sqrt(in_dim)
        # stored already transposed: (in, out) so y = x @ W + b
        w = jax.random.uniform(kw, (in_dim, out_dim), jnp.float32, -bound, bound)
        b = jax.random.uniform(kb, (out_dim,), jnp.float32, -bound, bound)
        gamma = jnp.ones((out_dim,), jnp.float32)
        beta = jnp.zeros((out_dim,), jnp.float32)
        running_mean = jnp.zeros((out_dim,), jnp.float32)
        running_var = jnp.ones((out_dim,), jnp.float32)
        params.append((w, b, gamma, beta, running_mean, running_var))
        in_dim = out_dim
    return params


def prepare_params(params, param_dtype=jnp.float32):
    """Fold eval-mode BatchNorm1d into Linear W/b ONCE, zero-pad hidden dims to 128,
    and stack the resident params into a small number of arrays.

    scale = gamma / sqrt(running_var + eps); shift = beta - running_mean * scale
      (x @ W + b) * scale + shift == x @ (W * scale) + (b * scale + shift)

    Zero-padding is exact: padded columns see 0 weights + 0 bias, LeakyReLU(0)=0,
    and padded rows of the next layer multiply those zeros.
    """
    num_layers = len(params) - 1
    assert num_layers >= 2, "kernel expects num_layers >= 2 (module default is 3)"
    hidden_dim = params[0][0].shape[1]
    hp = _round_up(hidden_dim, _LANE)
    pad = hp - hidden_dim

    folded_w, folded_b = [], []
    for (w, b, gamma, beta, rmean, rvar) in params[:-1]:
        scale = gamma * jax.lax.rsqrt(rvar + BN_EPS)
        shift = beta - rmean * scale
        folded_w.append(w * scale[None, :])
        folded_b.append(b * scale + shift)
    w_out, b_out = params[-1][0], params[-1][1]

    w1 = jnp.pad(folded_w[0], ((0, 0), (0, pad)))                        # (noise, Hp)
    w_mid = jnp.stack([jnp.pad(w, ((0, pad), (0, pad)))
                       for w in folded_w[1:]])                           # (L-1, Hp, Hp)
    b_hid = jnp.stack([jnp.pad(b, (0, pad)) for b in folded_b])[:, None, :]  # (L, 1, Hp)
    w4 = jnp.pad(w_out, ((0, pad), (0, 0)))                              # (Hp, out)
    b4 = b_out.reshape(1, -1)                                            # (1, out)

    return {
        "w1": w1.astype(param_dtype),
        "w_mid": w_mid.astype(param_dtype),
        "b_hid": b_hid.astype(param_dtype),
        "w4": w4.astype(param_dtype),
        "b4": b4.astype(jnp.float32),
    }


# ---------------------------------------------------------------------------
# Wrapper
# ---------------------------------------------------------------------------
def time_series_generator(z, prepared, *, tile_b=None, out_dtype=jnp.float32):
    """Fused forward pass. `prepared` comes from prepare_params()."""
    B, noise_dim = z.shape
    w1, w_mid, b_hid = prepared["w1"], prepared["w_mid"], prepared["b_hid"]
    w4, b4 = prepared["w4"], prepared["b4"]
    hp = w1.shape[1]
    output_dim = w4.shape[1]
    n_mid = w_mid.shape[0]
    act_dtype = w1.dtype                      # bf16 intermediates when weights are bf16
    out_itemsize = jnp.dtype(out_dtype).itemsize

    param_arrays = (w1, w_mid, b_hid, w4, b4)
    param_bytes = sum(int(a.size) * a.dtype.itemsize for a in param_arrays)

    # --- Batch tile selection ---------------------------------------------
    # per-row VMEM cost: double-buffered z/out tiles + activation working set.
    per_row = (2 * (noise_dim * z.dtype.itemsize + output_dim * out_itemsize)
               + 3 * max(hp, output_dim) * 4)
    tile_budget = _VMEM_TILE_BUDGET - param_bytes - (4 << 20)
    tile_cap = max(8, _round_down(max(tile_budget, 8 * per_row) // per_row, 8))

    if tile_b is None:
        tile_b = 8192                         # amortize ~0.35us/step grid overhead
    tile_b = max(1, min(tile_b, B, tile_cap))
    if B >= 16:
        # Guarantee >= 2 grid steps so "parallel" semantics can split work
        # across v7x's two TensorCores.
        tile_b = min(tile_b, max(8, _round_down(B // 2, 8)))
    if tile_b != B:
        tile_b = max(8, _round_down(tile_b, 8))   # keep (8,128) sublane divisibility
    grid = (pl.cdiv(B, tile_b),)

    # --- VMEM budget (real footprint, capped below v7x physical) -----------
    vmem_needed = (param_bytes
                   + 2 * tile_b * (noise_dim * z.dtype.itemsize
                                   + output_dim * out_itemsize)
                   + 3 * tile_b * max(hp, output_dim) * 4)
    vmem_limit = int(min(_VMEM_CAP_BYTES, max(16 << 20, vmem_needed + (4 << 20))))

    kernel = _make_generator_kernel(n_mid, act_dtype)

    in_specs = [
        pl.BlockSpec((tile_b, noise_dim), lambda i: (i, 0)),          # z: pipelined
        pl.BlockSpec(w1.shape, lambda i: (0, 0)),                     # resident params
        pl.BlockSpec(w_mid.shape, lambda i: (0, 0, 0)),
        pl.BlockSpec(b_hid.shape, lambda i: (0, 0, 0)),
        pl.BlockSpec(w4.shape, lambda i: (0, 0)),
        pl.BlockSpec(b4.shape, lambda i: (0, 0)),
    ]

    out = pl.pallas_call(
        kernel,
        out_shape=jax.ShapeDtypeStruct((B, output_dim), out_dtype),
        grid=grid,
        in_specs=in_specs,
        out_specs=pl.BlockSpec((tile_b, output_dim), lambda i: (i, 0)),
        compiler_params=pltpu.CompilerParams(
            dimension_semantics=("parallel",),    # batch rows are independent
            vmem_limit_bytes=vmem_limit),
    )(z, w1, w_mid, b_hid, w4, b4)
    return out


# ---------------------------------------------------------------------------
# Reference
# ---------------------------------------------------------------------------
def reference_forward(z, params):
    """Pure-JAX reference matching the PyTorch eval() forward (BN unfolded, unpadded)."""
    x = z
    for (w, b, gamma, beta, rmean, rvar) in params[:-1]:
        h = x @ w + b
        h = (h - rmean) * (gamma / jnp.sqrt(rvar + BN_EPS)) + beta
        x = jnp.where(h > 0, h, LEAKY_SLOPE * h)
    w4, b4 = params[-1][0], params[-1][1]
    return jnp.tanh(x @ w4 + b4)


if __name__ == "__main__":
    # small shapes consistent with the module (noise_dim, hidden_dim, output_dim)
    NOISE_DIM, HIDDEN_DIM, OUTPUT_DIM = 32, 64, 128

    key = jax.random.PRNGKey(0)
    key, kz1, kz2 = jax.random.split(key, 3)
    params = init_params(key, NOISE_DIM, HIDDEN_DIM, OUTPUT_DIM, num_layers=3)

    # --- f32 weights, single-tile batch: tight numerical check -------------
    z8 = jax.random.normal(kz1, (8, NOISE_DIM), jnp.float32)
    ref8 = reference_forward(z8, params)
    p_f32 = prepare_params(params, jnp.float32)
    out8 = jax.block_until_ready(time_series_generator(z8, p_f32))
    assert out8.shape == (8, OUTPUT_DIM)
    assert jnp.all(jnp.isfinite(out8))
    assert jnp.allclose(out8, ref8, atol=1e-4, rtol=1e-4)

    # --- f32 weights, multi-tile batch (>=2 grid steps) ---------------------
    z64 = jax.random.normal(kz2, (64, NOISE_DIM), jnp.float32)
    ref64 = reference_forward(z64, params)
    out64 = jax.block_until_ready(time_series_generator(z64, p_f32))
    assert out64.shape == (64, OUTPUT_DIM)
    assert jnp.allclose(out64, ref64, atol=1e-4, rtol=1e-4)

    # --- bf16 weights + bf16 intermediates (native MXU/VPU dtype): loose check
    p_bf16 = prepare_params(params, jnp.bfloat16)
    out_bf16 = jax.block_until_ready(time_series_generator(z64, p_bf16))
    assert out_bf16.shape == (64, OUTPUT_DIM)
    assert jnp.all(jnp.isfinite(out_bf16))
    assert jnp.allclose(out_bf16, ref64, atol=5e-2, rtol=5e-2)

    # --- bf16 output (reduced HBM writeback) --------------------------------
    out_bf16_o = jax.block_until_ready(
        time_series_generator(z64, p_bf16, out_dtype=jnp.bfloat16))
    assert out_bf16_o.dtype == jnp.bfloat16
    assert jnp.all(jnp.isfinite(out_bf16_o.astype(jnp.float32)))

    print("KERNEL_OK")
</pallas_src>

<mosaic_0001>
module attributes {stable_mosaic.version = 11 : i64} {
  func.func @kernel(%arg0: i32, %arg1: memref<8x32xf32, #tpu.memory_space<vmem>>, %arg2: memref<32x128xf32, #tpu.memory_space<vmem>>, %arg3: memref<2x128x128xf32, #tpu.memory_space<vmem>>, %arg4: memref<3x1x128xf32, #tpu.memory_space<vmem>>, %arg5: memref<128x128xf32, #tpu.memory_space<vmem>>, %arg6: memref<1x128xf32, #tpu.memory_space<vmem>>, %arg7: memref<8x128xf32, #tpu.memory_space<vmem>>) attributes {dimension_semantics = [#tpu.dimension_semantics<parallel>], iteration_bounds = array<i64: 1>, scalar_prefetch = 0 : i64, scratch_operands = 0 : i64, tpu.core_type = #tpu.core_type<tc>, window_params = [{transform_indices = @transform_0, window_bounds = array<i64: 8, 32>}, {pipeline_mode = #tpu.pipeline_mode<synchronous>, transform_indices = @transform_1, window_bounds = array<i64: 32, 128>}, {pipeline_mode = #tpu.pipeline_mode<synchronous>, transform_indices = @transform_2, window_bounds = array<i64: 2, 128, 128>}, {pipeline_mode = #tpu.pipeline_mode<synchronous>, transform_indices = @transform_3, window_bounds = array<i64: 3, 1, 128>}, {pipeline_mode = #tpu.pipeline_mode<synchronous>, transform_indices = @transform_4, window_bounds = array<i64: 128, 128>}, {pipeline_mode = #tpu.pipeline_mode<synchronous>, transform_indices = @transform_5, window_bounds = array<i64: 1, 128>}, {transform_indices = @transform_6, window_bounds = array<i64: 8, 128>}]} {
    %c0 = arith.constant 0 : index
    %c0_0 = arith.constant 0 : index
    %0 = vector.load %arg1[%c0, %c0_0] : memref<8x32xf32, #tpu.memory_space<vmem>>, vector<8x32xf32>
    %c0_1 = arith.constant 0 : index
    %c0_2 = arith.constant 0 : index
    %1 = vector.load %arg2[%c0_1, %c0_2] : memref<32x128xf32, #tpu.memory_space<vmem>>, vector<32x128xf32>
    %c0_3 = arith.constant 0 : index
    %c0_4 = arith.constant 0 : index
    %c0_5 = arith.constant 0 : index
    %2 = vector.load %arg4[%c0_3, %c0_4, %c0_5] : memref<3x1x128xf32, #tpu.memory_space<vmem>>, vector<1x1x128xf32>
    %3 = vector.shape_cast %2 : vector<1x1x128xf32> to vector<1x128xf32>
    %cst = arith.constant dense<0.000000e+00> : vector<8x128xf32>
    %4 = tpu.matmul %0, %1, %cst {dimension_numbers = #tpu.dot_dimension_numbers<[1], [0], [0], [1], [0, 0, 1, 1], [], []>} : vector<8x32xf32>, vector<32x128xf32>, vector<8x128xf32> -> vector<8x128xf32>
    %5 = vector.broadcast %3 : vector<1x128xf32> to vector<8x128xf32>
    %6 = arith.addf %4, %5 : vector<8x128xf32>
    %cst_6 = arith.constant 0.000000e+00 : f32
    %7 = vector.broadcast %cst_6 : f32 to vector<8x128xf32>
    %8 = arith.cmpf ogt, %6, %7 : vector<8x128xf32>
    %cst_7 = arith.constant 2.000000e-01 : f32
    %9 = vector.broadcast %cst_7 : f32 to vector<8x128xf32>
    %10 = arith.mulf %9, %6 : vector<8x128xf32>
    %11 = arith.select %8, %6, %10 : vector<8x128xi1>, vector<8x128xf32>
    %c0_8 = arith.constant 0 : index
    %c0_9 = arith.constant 0 : index
    %c0_10 = arith.constant 0 : index
    %12 = vector.load %arg3[%c0_8, %c0_9, %c0_10] : memref<2x128x128xf32, #tpu.memory_space<vmem>>, vector<1x128x128xf32>
    %13 = vector.shape_cast %12 : vector<1x128x128xf32> to vector<128x128xf32>
    %c1 = arith.constant 1 : index
    %c0_11 = arith.constant 0 : index
    %c0_12 = arith.constant 0 : index
    %14 = vector.load %arg4[%c1, %c0_11, %c0_12] : memref<3x1x128xf32, #tpu.memory_space<vmem>>, vector<1x1x128xf32>
    %15 = vector.shape_cast %14 : vector<1x1x128xf32> to vector<1x128xf32>
    %cst_13 = arith.constant dense<0.000000e+00> : vector<8x128xf32>
    %16 = tpu.matmul %11, %13, %cst_13 {dimension_numbers = #tpu.dot_dimension_numbers<[1], [0], [0], [1], [0, 0, 1, 1], [], []>} : vector<8x128xf32>, vector<128x128xf32>, vector<8x128xf32> -> vector<8x128xf32>
    %17 = vector.broadcast %15 : vector<1x128xf32> to vector<8x128xf32>
    %18 = arith.addf %16, %17 : vector<8x128xf32>
    %cst_14 = arith.constant 0.000000e+00 : f32
    %19 = vector.broadcast %cst_14 : f32 to vector<8x128xf32>
    %20 = arith.cmpf ogt, %18, %19 : vector<8x128xf32>
    %cst_15 = arith.constant 2.000000e-01 : f32
    %21 = vector.broadcast %cst_15 : f32 to vector<8x128xf32>
    %22 = arith.mulf %21, %18 : vector<8x128xf32>
    %23 = arith.select %20, %18, %22 : vector<8x128xi1>, vector<8x128xf32>
    %c1_16 = arith.constant 1 : index
    %c0_17 = arith.constant 0 : index
    %c0_18 = arith.constant 0 : index
    %24 = vector.load %arg3[%c1_16, %c0_17, %c0_18] : memref<2x128x128xf32, #tpu.memory_space<vmem>>, vector<1x128x128xf32>
    %25 = vector.shape_cast %24 : vector<1x128x128xf32> to vector<128x128xf32>
    %c2 = arith.constant 2 : index
    %c0_19 = arith.constant 0 : index
    %c0_20 = arith.constant 0 : index
    %26 = vector.load %arg4[%c2, %c0_19, %c0_20] : memref<3x1x128xf32, #tpu.memory_space<vmem>>, vector<1x1x128xf32>
    %27 = vector.shape_cast %26 : vector<1x1x128xf32> to vector<1x128xf32>
    %cst_21 = arith.constant dense<0.000000e+00> : vector<8x128xf32>
    %28 = tpu.matmul %23, %25, %cst_21 {dimension_numbers = #tpu.dot_dimension_numbers<[1], [0], [0], [1], [0, 0, 1, 1], [], []>} : vector<8x128xf32>, vector<128x128xf32>, vector<8x128xf32> -> vector<8x128xf32>
    %29 = vector.broadcast %27 : vector<1x128xf32> to vector<8x128xf32>
    %30 = arith.addf %28, %29 : vector<8x128xf32>
    %cst_22 = arith.constant 0.000000e+00 : f32
    %31 = vector.broadcast %cst_22 : f32 to vector<8x128xf32>
    %32 = arith.cmpf ogt, %30, %31 : vector<8x128xf32>
    %cst_23 = arith.constant 2.000000e-01 : f32
    %33 = vector.broadcast %cst_23 : f32 to vector<8x128xf32>
    %34 = arith.mulf %33, %30 : vector<8x128xf32>
    %35 = arith.select %32, %30, %34 : vector<8x128xi1>, vector<8x128xf32>
    %c0_24 = arith.constant 0 : index
    %c0_25 = arith.constant 0 : index
    %36 = vector.load %arg5[%c0_24, %c0_25] : memref<128x128xf32, #tpu.memory_space<vmem>>, vector<128x128xf32>
    %cst_26 = arith.constant dense<0.000000e+00> : vector<8x128xf32>
    %37 = tpu.matmul %35, %36, %cst_26 {dimension_numbers = #tpu.dot_dimension_numbers<[1], [0], [0], [1], [0, 0, 1, 1], [], []>} : vector<8x128xf32>, vector<128x128xf32>, vector<8x128xf32> -> vector<8x128xf32>
    %c0_27 = arith.constant 0 : index
    %c0_28 = arith.constant 0 : index
    %38 = vector.load %arg6[%c0_27, %c0_28] : memref<1x128xf32, #tpu.memory_space<vmem>>, vector<1x128xf32>
    %39 = vector.broadcast %38 : vector<1x128xf32> to vector<8x128xf32>
    %40 = arith.addf %37, %39 : vector<8x128xf32>
    %41 = math.tanh %40 : vector<8x128xf32>
    %c0_29 = arith.constant 0 : index
    %c0_30 = arith.constant 0 : index
    %42 = vector.load %arg7[%c0_29, %c0_30] : memref<8x128xf32, #tpu.memory_space<vmem>>, vector<8x128xf32>
    tpu.vector_store %arg7[%c0_29, %c0_30], %41 {strides = array<i32>} : memref<8x128xf32, #tpu.memory_space<vmem>>, vector<8x128xf32>,
    return
  }
  func.func @transform_0(%arg0: i32) -> (i32, i32) {
    %c0_i32 = arith.constant 0 : i32
    %c0_i32_0 = arith.constant 0 : i32
    return %arg0, %c0_i32 : i32, i32
  }
  func.func @transform_1(%arg0: i32) -> (i32, i32) {
    %c0_i32 = arith.constant 0 : i32
    %c0_i32_0 = arith.constant 0 : i32
    %c0_i32_1 = arith.constant 0 : i32
    return %c0_i32, %c0_i32_0 : i32, i32
  }
  func.func @transform_2(%arg0: i32) -> (i32, i32, i32) {
    %c0_i32 = arith.constant 0 : i32
    %c0_i32_0 = arith.constant 0 : i32
    %c0_i32_1 = arith.constant 0 : i32
    %c0_i32_2 = arith.constant 0 : i32
    return %c0_i32, %c0_i32_0, %c0_i32_1 : i32, i32, i32
  }
  func.func @transform_3(%arg0: i32) -> (i32, i32, i32) {
    %c0_i32 = arith.constant 0 : i32
    %c0_i32_0 = arith.constant 0 : i32
    %c0_i32_1 = arith.constant 0 : i32
    %c0_i32_2 = arith.constant 0 : i32
    return %c0_i32, %c0_i32_0, %c0_i32_1 : i32, i32, i32
  }
  func.func @transform_4(%arg0: i32) -> (i32, i32) {
    %c0_i32 = arith.constant 0 : i32
    %c0_i32_0 = arith.constant 0 : i32
    %c0_i32_1 = arith.constant 0 : i32
    return %c0_i32, %c0_i32_0 : i32, i32
  }
  func.func @transform_5(%arg0: i32) -> (i32, i32) {
    %c0_i32 = arith.constant 0 : i32
    %c0_i32_0 = arith.constant 0 : i32
    %c0_i32_1 = arith.constant 0 : i32
    return %c0_i32, %c0_i32_0 : i32, i32
  }
  func.func @transform_6(%arg0: i32) -> (i32, i32) {
    %c0_i32 = arith.constant 0 : i32
    %c0_i32_0 = arith.constant 0 : i32
    return %arg0, %c0_i32 : i32, i32
  }
}

</mosaic_0001>

<llo_original>
// kernel: tpu_custom_call.1
$region0: #{tpu_custom_call.1}
  #allocation0 [shape = 'u32[]', space=smem, size = 0x4, offset = 0x4, fixed_abs, tag = 'smem constant byte address 0x4 - core index']
  #allocation1 [shape = 'u32[144,128]{1,0:T(1,128)}', space=vmem, size = 0x12000, scoped, tag = 'internal scratch']
  %s0 = inlined_call_operand.hbm [shape: f32[8,32], index: 0, kind: input, shape index: {}]
  %s1 = inlined_call_operand.hbm [shape: f32[32,128], index: 1, kind: input, shape index: {}]
  %s2 = inlined_call_operand.hbm [shape: f32[2,128,128], index: 2, kind: input, shape index: {}]
  %s3 = inlined_call_operand.vmem [shape: f32[3,1,128], index: 3, kind: input, shape index: {}]
  %s4 = inlined_call_operand.hbm [shape: f32[128,128], index: 4, kind: input, shape index: {}]
  %s5 = inlined_call_operand.vmem [shape: f32[1,128], index: 5, kind: input, shape index: {}]
  %s6 = inlined_call_operand.hbm [shape: f32[8,128], index: 6, kind: output, shape index: {}]
  %s7 = sld [smem:[#allocation0]]
  $region50: #{tpu_custom_call.1} parent=0
    _
  %s9 = ssub.s32 1, %s7
  %s10 = scalar_select 0, %s9, %s7
  $region1: #{tpu_custom_call.1} parent=0
    #allocation2 [shape = 'u8[4096]{0}', space=vmem, size = 0x1000, scoped, tag = 'input window, operand 0, single buffered']
    #allocation3 [shape = 's32[1]{0}', space=sflag, size = 0x4, scoped, tag = 'scoped memory for tpu_custom_call.1']
    #allocation4 [shape = 's32[1]{0}', space=sflag, size = 0x4, scoped, tag = 'scoped memory for tpu_custom_call.1']
    #allocation5 [shape = 'u8[16384]{0}', space=vmem, size = 0x4000, scoped, tag = 'input window, operand 1, single buffered']
    #allocation6 [shape = 's32[1]{0}', space=sflag, size = 0x4, scoped, tag = 'scoped memory for tpu_custom_call.1']
    #allocation7 [shape = 'u8[131072]{0}', space=vmem, size = 0x20000, scoped, tag = 'input window, operand 2, single buffered']
    #allocation8 [shape = 'u8[65536]{0}', space=vmem, size = 0x10000, scoped, tag = 'input window, operand 4, single buffered']
    #allocation9 [shape = 's32[1]{0}', space=sflag, size = 0x4, scoped, tag = 'scoped memory for tpu_custom_call.1']
    #allocation10 [shape = 'u8[4096]{0}', space=vmem, size = 0x1000, scoped, tag = 'output window, operand 0, single buffered']
    %11 = vsyncpa [#allocation3], 0
    %12 = vsyncpa [#allocation6], 0
    %13 = vsyncpa [#allocation9], 0
    %14 = vsyncpa [#allocation4], 0
    // Predicated region
    $region2: #{tpu_custom_call.1} parent=1 // pred_check
      _
    $region3: #{tpu_custom_call.1} parent=1 // pred_check_branch
      %16 = sbr.rel (0) target = $region5
    $region4: #{tpu_custom_call.1} parent=1 // pred_region
      %s18 = ssub.s32 128, 128
      %19 = vsyncadd [#allocation3], %s18
      %s21 = sshll.u32 [#allocation2], 4
      %s22 = int_to_ptr.vmem [resolvable:$true] %s21
      %24 = dma.hbm_to_vmem [thread:$0]  %s0, 128, %s22, [#allocation3]
    $region5: #{tpu_custom_call.1} parent=1 // pred_fallthru
      _
    // Predicated region
    $region6: #{tpu_custom_call.1} parent=1 // pred_check
      _
    $region7: #{tpu_custom_call.1} parent=1 // pred_check_branch
      %26 = sbr.rel (0) target = $region9
    $region8: #{tpu_custom_call.1} parent=1 // pred_region
      %s28 = ssub.s32 512, 512
      %29 = vsyncadd [#allocation6], %s28
      %s30 = sshll.u32 [#allocation5], 4
      %s31 = int_to_ptr.vmem [resolvable:$true] %s30
      %36 = dma.hbm_to_vmem [thread:$0]  %s1, 512, %s31, [#allocation6], 128, 128, 8
    $region9: #{tpu_custom_call.1} parent=1 // pred_fallthru
      _
    // Predicated region
    $region10: #{tpu_custom_call.1} parent=1 // pred_check
      _
    $region11: #{tpu_custom_call.1} parent=1 // pred_check_branch
      %38 = sbr.rel (0) target = $region13
    $region12: #{tpu_custom_call.1} parent=1 // pred_region
      %s40 = ssub.s32 4096, 4096
      %41 = vsyncadd [#allocation6], %s40
      %s42 = sshll.u32 [#allocation7], 4
      %s43 = int_to_ptr.vmem [resolvable:$true] %s42
      %48 = dma.hbm_to_vmem [thread:$0]  %s2, 4096, %s43, [#allocation6], 128, 128, 8
    $region13: #{tpu_custom_call.1} parent=1 // pred_fallthru
      _
    // Predicated region
    $region14: #{tpu_custom_call.1} parent=1 // pred_check
      _
    $region15: #{tpu_custom_call.1} parent=1 // pred_check_branch
      %50 = sbr.rel (0) target = $region17
    $region16: #{tpu_custom_call.1} parent=1 // pred_region
      _
    $region17: #{tpu_custom_call.1} parent=1 // pred_fallthru
      _
    // Predicated region
    $region18: #{tpu_custom_call.1} parent=1 // pred_check
      _
    $region19: #{tpu_custom_call.1} parent=1 // pred_check_branch
      %52 = sbr.rel (0) target = $region21
    $region20: #{tpu_custom_call.1} parent=1 // pred_region
      %s54 = ssub.s32 2048, 2048
      %55 = vsyncadd [#allocation9], %s54
      %s56 = sshll.u32 [#allocation8], 4
      %s57 = int_to_ptr.vmem [resolvable:$true] %s56
      %62 = dma.hbm_to_vmem [thread:$0]  %s4, 2048, %s57, [#allocation9], 128, 128, 8
    $region21: #{tpu_custom_call.1} parent=1 // pred_fallthru
      _
    // Predicated region
    $region22: #{tpu_custom_call.1} parent=1 // pred_check
      _
    $region23: #{tpu_custom_call.1} parent=1 // pred_check_branch
      %64 = sbr.rel (0) target = $region25
    $region24: #{tpu_custom_call.1} parent=1 // pred_region
      _
    $region25: #{tpu_custom_call.1} parent=1 // pred_fallthru
      _
    // Predicated region
    $region26: #{tpu_custom_call.1} parent=1 // pred_check
      _
    $region27: #{tpu_custom_call.1} parent=1 // pred_check_branch
      %66 = sbr.rel (0) target = $region29
    $region28: #{tpu_custom_call.1} parent=1 // pred_region
      %67 = dma.done [#allocation3], 128
    $region29: #{tpu_custom_call.1} parent=1 // pred_fallthru
      _
    // Predicated region
    $region30: #{tpu_custom_call.1} parent=1 // pred_check
      _
    $region31: #{tpu_custom_call.1} parent=1 // pred_check_branch
      %69 = sbr.rel (0) target = $region33
    $region32: #{tpu_custom_call.1} parent=1 // pred_region
      %70 = dma.done [#allocation6], 512
    $region33: #{tpu_custom_call.1} parent=1 // pred_fallthru
      _
    // Predicated region
    $region34: #{tpu_custom_call.1} parent=1 // pred_check
      _
    $region35: #{tpu_custom_call.1} parent=1 // pred_check_branch
      %72 = sbr.rel (0) target = $region37
    $region36: #{tpu_custom_call.1} parent=1 // pred_region
      %73 = dma.done [#allocation6], 4096
    $region37: #{tpu_custom_call.1} parent=1 // pred_fallthru
      _
    // Predicated region
    $region38: #{tpu_custom_call.1} parent=1 // pred_check
      _
    $region39: #{tpu_custom_call.1} parent=1 // pred_check_branch
      %75 = sbr.rel (0) target = $region41
    $region40: #{tpu_custom_call.1} parent=1 // pred_region
      %76 = dma.done [#allocation9], 2048
    $region41: #{tpu_custom_call.1} parent=1 // pred_fallthru
      _
    %v77 = vld [vmem:[#allocation2] sm:$0xff]
    %v78 = vld [vmem:[#allocation5] sm:$0xff]
    %v79 = vld [vmem:[#allocation5 + $0x8] sm:$0xff]
    %v80 = vld [vmem:[#allocation5 + $0x10] sm:$0xff]
    %v81 = vld [vmem:[#allocation5 + $0x18] sm:$0xff]
    %v82 = vld [vmem:[%s3] sm:$0x1]
    %v84 = vlaneseq
    %v85 = vshrl.u32 %v84, 7
    %v86 = vsub.s32 0, %v85
    %v87 = vrot.slane %v82, %v86
    %vm89 = vcmask 261120
    %v91 = vsel %vm89, %v77, 0
    %93 = vmatprep.subr.mxu0 0.0
    %94 = vmatpush1.msra.mxu0 %v78
    %95 = vmatprep.subr.mxu0 0.0
    %96 = vmatpush1.msra.mxu0 %v79
    %97 = vmatprep.subr.mxu0 0.0
    %98 = vmatpush1.msra.mxu0 %v80
    %99 = vmatprep.subr.mxu0 0.0
    %100 = vmatpush1.msra.mxu0 %v81
    %101 = vmatprep.subr.mxu0 0.0
    %102 = vmatpush1.msra.mxu0 0.0
    %103 = vmatprep.subr.mxu0 0.0
    %104 = vmatpush1.msra.mxu0 0.0
    %105 = vmatprep.subr.mxu0 0.0
    %106 = vmatpush1.msra.mxu0 0.0
    %107 = vmatprep.subr.mxu0 0.0
    %108 = vmatpush1.msra.mxu0 0.0
    %109 = vmatprep.subr.mxu0 0.0
    %110 = vmatpush1.msra.mxu0 0.0
    %111 = vmatprep.subr.mxu0 0.0
    %112 = vmatpush1.msra.mxu0 0.0
    %113 = vmatprep.subr.mxu0 0.0
    %114 = vmatpush1.msra.mxu0 0.0
    %115 = vmatprep.subr.mxu0 0.0
    %116 = vmatpush1.msra.mxu0 0.0
    %117 = vmatprep.subr.mxu0 0.0
    %118 = vmatpush1.msra.mxu0 0.0
    %119 = vmatprep.subr.mxu0 0.0
    %120 = vmatpush1.msra.mxu0 0.0
    %121 = vmatprep.subr.mxu0 0.0
    %122 = vmatpush1.msra.mxu0 0.0
    %123 = vmatprep.subr.mxu0 0.0
    %124 = vmatpush1.msra.mxu0 0.0
    %125 = vmatprep.subr.mxu0 0.0
    %126 = vmatpush1.msra.mxu0 0.0
    %127 = vmatprep.subr.mxu0 0.0
    %128 = vmatpush1.msra.mxu0 0.0
    %129 = vmatprep.subr.mxu0 0.0
    %130 = vmatpush1.msra.mxu0 0.0
    %131 = vmatprep.subr.mxu0 0.0
    %132 = vmatpush1.msra.mxu0 0.0
    %133 = vmatprep.subr.mxu0 0.0
    %134 = vmatpush1.msra.mxu0 0.0
    %135 = vmatprep.subr.mxu0 0.0
    %136 = vmatpush1.msra.mxu0 0.0
    %137 = vmatprep.subr.mxu0 0.0
    %138 = vmatpush1.msra.mxu0 0.0
    %139 = vmatprep.subr.mxu0 0.0
    %140 = vmatpush1.msra.mxu0 0.0
    %141 = vmatprep.subr.mxu0 0.0
    %142 = vmatpush1.msra.mxu0 0.0
    %143 = vmatprep.subr.mxu0 0.0
    %144 = vmatpush1.msra.mxu0 0.0
    %145 = vmatprep.subr.mxu0 0.0
    %146 = vmatpush1.msra.mxu0 0.0
    %147 = vmatprep.subr.mxu0 0.0
    %148 = vmatpush1.msra.mxu0 0.0
    %149 = vmatprep.subr.mxu0 0.0
    %150 = vmatpush1.msra.mxu0 0.0
    %151 = vmatprep.subr.mxu0 0.0
    %152 = vmatpush1.msra.mxu0 0.0
    %153 = vmatprep.subr.mxu0 0.0
    %154 = vmatpush1.msra.mxu0 0.0
    %155 = vmatprep.subr.mxu0 0.0
    %156 = vmatpush1.msra.mxu0 0.0
    %157 = vmatprep.mubr.f32.mxu0 0.0
    %158 = vmatmul.mubr.f32.gmra.mrb[0].mxu0 %v91
    %v159 = vpop.f32.mrb[0].mxu0
    %v160 = vadd.f32 %v87, %v159
    %v161 = vpop.f32.mrb[0].mxu0
    %162 = vdwg.mxu0
    %vm163 = vcmp.gt.f32.partialorder %v160, 0.0
    %v164 = vmul.f32 %v160, 0.2
    %v165 = vsel %vm163, %v160, %v164
    %v166 = vld [vmem:[#allocation7] sm:$0xff]
    %v167 = vld [vmem:[#allocation7 + $0x8] sm:$0xff]
    %v168 = vld [vmem:[#allocation7 + $0x10] sm:$0xff]
    %v169 = vld [vmem:[#allocation7 + $0x18] sm:$0xff]
    %v170 = vld [vmem:[#allocation7 + $0x20] sm:$0xff]
    %v171 = vld [vmem:[#allocation7 + $0x28] sm:$0xff]
    %v172 = vld [vmem:[#allocation7 + $0x30] sm:$0xff]
    %v173 = vld [vmem:[#allocation7 + $0x38] sm:$0xff]
    %v174 = vld [vmem:[#allocation7 + $0x40] sm:$0xff]
    %v175 = vld [vmem:[#allocation7 + $0x48] sm:$0xff]
    %v176 = vld [vmem:[#allocation7 + $0x50] sm:$0xff]
    %v177 = vld [vmem:[#allocation7 + $0x58] sm:$0xff]
    %v178 = vld [vmem:[#allocation7 + $0x60] sm:$0xff]
    %v179 = vld [vmem:[#allocation7 + $0x68] sm:$0xff]
    %v180 = vld [vmem:[#allocation7 + $0x70] sm:$0xff]
    %v181 = vld [vmem:[#allocation7 + $0x78] sm:$0xff]
    %s182 = scalar_lea.vmem %s3, 1
    %v183 = vld [vmem:[%s182] sm:$0x1]
    %v185 = vlaneseq
    %v186 = vshrl.u32 %v185, 7
    %v187 = vsub.s32 0, %v186
    %v188 = vrot.slane %v183, %v187
    %190 = vmatprep.subr.mxu0 0.0
    %191 = vmatpush1.msra.mxu0 %v166
    %192 = vmatprep.subr.mxu0 0.0
    %193 = vmatpush1.msra.mxu0 %v167
    %194 = vmatprep.subr.mxu0 0.0
    %195 = vmatpush1.msra.mxu0 %v168
    %196 = vmatprep.subr.mxu0 0.0
    %197 = vmatpush1.msra.mxu0 %v169
    %198 = vmatprep.subr.mxu0 0.0
    %199 = vmatpush1.msra.mxu0 %v170
    %200 = vmatprep.subr.mxu0 0.0
    %201 = vmatpush1.msra.mxu0 %v171
    %202 = vmatprep.subr.mxu0 0.0
    %203 = vmatpush1.msra.mxu0 %v172
    %204 = vmatprep.subr.mxu0 0.0
    %205 = vmatpush1.msra.mxu0 %v173
    %206 = vmatprep.subr.mxu0 0.0
    %207 = vmatpush1.msra.mxu0 %v174
    %208 = vmatprep.subr.mxu0 0.0
    %209 = vmatpush1.msra.mxu0 %v175
    %210 = vmatprep.subr.mxu0 0.0
    %211 = vmatpush1.msra.mxu0 %v176
    %212 = vmatprep.subr.mxu0 0.0
    %213 = vmatpush1.msra.mxu0 %v177
    %214 = vmatprep.subr.mxu0 0.0
    %215 = vmatpush1.msra.mxu0 %v178
    %216 = vmatprep.subr.mxu0 0.0
    %217 = vmatpush1.msra.mxu0 %v179
    %218 = vmatprep.subr.mxu0 0.0
    %219 = vmatpush1.msra.mxu0 %v180
    %220 = vmatprep.subr.mxu0 0.0
    %221 = vmatpush1.msra.mxu0 %v181
    %222 = vmatprep.subr.mxu0 0.0
    %223 = vmatpush1.msra.mxu0 0.0
    %224 = vmatprep.subr.mxu0 0.0
    %225 = vmatpush1.msra.mxu0 0.0
    %226 = vmatprep.subr.mxu0 0.0
    %227 = vmatpush1.msra.mxu0 0.0
    %228 = vmatprep.subr.mxu0 0.0
    %229 = vmatpush1.msra.mxu0 0.0
    %230 = vmatprep.subr.mxu0 0.0
    %231 = vmatpush1.msra.mxu0 0.0
    %232 = vmatprep.subr.mxu0 0.0
    %233 = vmatpush1.msra.mxu0 0.0
    %234 = vmatprep.subr.mxu0 0.0
    %235 = vmatpush1.msra.mxu0 0.0
    %236 = vmatprep.subr.mxu0 0.0
    %237 = vmatpush1.msra.mxu0 0.0
    %238 = vmatprep.subr.mxu0 0.0
    %239 = vmatpush1.msra.mxu0 0.0
    %240 = vmatprep.subr.mxu0 0.0
    %241 = vmatpush1.msra.mxu0 0.0
    %242 = vmatprep.subr.mxu0 0.0
    %243 = vmatpush1.msra.mxu0 0.0
    %244 = vmatprep.subr.mxu0 0.0
    %245 = vmatpush1.msra.mxu0 0.0
    %246 = vmatprep.subr.mxu0 0.0
    %247 = vmatpush1.msra.mxu0 0.0
    %248 = vmatprep.subr.mxu0 0.0
    %249 = vmatpush1.msra.mxu0 0.0
    %250 = vmatprep.subr.mxu0 0.0
    %251 = vmatpush1.msra.mxu0 0.0
    %252 = vmatprep.subr.mxu0 0.0
    %253 = vmatpush1.msra.mxu0 0.0
    %254 = vmatprep.mubr.f32.mxu0 0.0
    %255 = vmatmul.mubr.f32.gmra.mrb[0].mxu0 %v165
    %v256 = vpop.f32.mrb[0].mxu0
    %v257 = vadd.f32 %v188, %v256
    %v258 = vpop.f32.mrb[0].mxu0
    %259 = vdwg.mxu0
    %vm260 = vcmp.gt.f32.partialorder %v257, 0.0
    %v261 = vmul.f32 %v257, 0.2
    %v262 = vsel %vm260, %v257, %v261
    %s263 = scalar_lea.vmem [#allocation7], 128
    %v264 = vld [vmem:[%s263] sm:$0xff]
    %v265 = vld [vmem:[%s263 + $0x8] sm:$0xff]
    %v266 = vld [vmem:[%s263 + $0x10] sm:$0xff]
    %v267 = vld [vmem:[%s263 + $0x18] sm:$0xff]
    %v268 = vld [vmem:[%s263 + $0x20] sm:$0xff]
    %v269 = vld [vmem:[%s263 + $0x28] sm:$0xff]
    %v270 = vld [vmem:[%s263 + $0x30] sm:$0xff]
    %v271 = vld [vmem:[%s263 + $0x38] sm:$0xff]
    %v272 = vld [vmem:[%s263 + $0x40] sm:$0xff]
    %v273 = vld [vmem:[%s263 + $0x48] sm:$0xff]
    %v274 = vld [vmem:[%s263 + $0x50] sm:$0xff]
    %v275 = vld [vmem:[%s263 + $0x58] sm:$0xff]
    %v276 = vld [vmem:[%s263 + $0x60] sm:$0xff]
    %v277 = vld [vmem:[%s263 + $0x68] sm:$0xff]
    %v278 = vld [vmem:[%s263 + $0x70] sm:$0xff]
    %v279 = vld [vmem:[%s263 + $0x78] sm:$0xff]
    %s280 = scalar_lea.vmem %s3, 2
    %v281 = vld [vmem:[%s280] sm:$0x1]
    %v283 = vlaneseq
    %v284 = vshrl.u32 %v283, 7
    %v285 = vsub.s32 0, %v284
    %v286 = vrot.slane %v281, %v285
    %288 = vmatprep.subr.mxu0 0.0
    %289 = vmatpush1.msra.mxu0 %v264
    %290 = vmatprep.subr.mxu0 0.0
    %291 = vmatpush1.msra.mxu0 %v265
    %292 = vmatprep.subr.mxu0 0.0
    %293 = vmatpush1.msra.mxu0 %v266
    %294 = vmatprep.subr.mxu0 0.0
    %295 = vmatpush1.msra.mxu0 %v267
    %296 = vmatprep.subr.mxu0 0.0
    %297 = vmatpush1.msra.mxu0 %v268
    %298 = vmatprep.subr.mxu0 0.0
    %299 = vmatpush1.msra.mxu0 %v269
    %300 = vmatprep.subr.mxu0 0.0
    %301 = vmatpush1.msra.mxu0 %v270
    %302 = vmatprep.subr.mxu0 0.0
    %303 = vmatpush1.msra.mxu0 %v271
    %304 = vmatprep.subr.mxu0 0.0
    %305 = vmatpush1.msra.mxu0 %v272
    %306 = vmatprep.subr.mxu0 0.0
    %307 = vmatpush1.msra.mxu0 %v273
    %308 = vmatprep.subr.mxu0 0.0
    %309 = vmatpush1.msra.mxu0 %v274
    %310 = vmatprep.subr.mxu0 0.0
    %311 = vmatpush1.msra.mxu0 %v275
    %312 = vmatprep.subr.mxu0 0.0
    %313 = vmatpush1.msra.mxu0 %v276
    %314 = vmatprep.subr.mxu0 0.0
    %315 = vmatpush1.msra.mxu0 %v277
    %316 = vmatprep.subr.mxu0 0.0
    %317 = vmatpush1.msra.mxu0 %v278
    %318 = vmatprep.subr.mxu0 0.0
    %319 = vmatpush1.msra.mxu0 %v279
    %320 = vmatprep.subr.mxu0 0.0
    %321 = vmatpush1.msra.mxu0 0.0
    %322 = vmatprep.subr.mxu0 0.0
    %323 = vmatpush1.msra.mxu0 0.0
    %324 = vmatprep.subr.mxu0 0.0
    %325 = vmatpush1.msra.mxu0 0.0
    %326 = vmatprep.subr.mxu0 0.0
    %327 = vmatpush1.msra.mxu0 0.0
    %328 = vmatprep.subr.mxu0 0.0
    %329 = vmatpush1.msra.mxu0 0.0
    %330 = vmatprep.subr.mxu0 0.0
    %331 = vmatpush1.msra.mxu0 0.0
    %332 = vmatprep.subr.mxu0 0.0
    %333 = vmatpush1.msra.mxu0 0.0
    %334 = vmatprep.subr.mxu0 0.0
    %335 = vmatpush1.msra.mxu0 0.0
    %336 = vmatprep.subr.mxu0 0.0
    %337 = vmatpush1.msra.mxu0 0.0
    %338 = vmatprep.subr.mxu0 0.0
    %339 = vmatpush1.msra.mxu0 0.0
    %340 = vmatprep.subr.mxu0 0.0
    %341 = vmatpush1.msra.mxu0 0.0
    %342 = vmatprep.subr.mxu0 0.0
    %343 = vmatpush1.msra.mxu0 0.0
    %344 = vmatprep.subr.mxu0 0.0
    %345 = vmatpush1.msra.mxu0 0.0
    %346 = vmatprep.subr.mxu0 0.0
    %347 = vmatpush1.msra.mxu0 0.0
    %348 = vmatprep.subr.mxu0 0.0
    %349 = vmatpush1.msra.mxu0 0.0
    %350 = vmatprep.subr.mxu0 0.0
    %351 = vmatpush1.msra.mxu0 0.0
    %352 = vmatprep.mubr.f32.mxu0 0.0
    %353 = vmatmul.mubr.f32.gmra.mrb[0].mxu0 %v262
    %v354 = vpop.f32.mrb[0].mxu0
    %v355 = vadd.f32 %v286, %v354
    %v356 = vpop.f32.mrb[0].mxu0
    %357 = vdwg.mxu0
    %vm358 = vcmp.gt.f32.partialorder %v355, 0.0
    %v359 = vmul.f32 %v355, 0.2
    %v360 = vsel %vm358, %v355, %v359
    %v361 = vld [vmem:[#allocation8] sm:$0xff]
    %v362 = vld [vmem:[#allocation8 + $0x8] sm:$0xff]
    %v363 = vld [vmem:[#allocation8 + $0x10] sm:$0xff]
    %v364 = vld [vmem:[#allocation8 + $0x18] sm:$0xff]
    %v365 = vld [vmem:[#allocation8 + $0x20] sm:$0xff]
    %v366 = vld [vmem:[#allocation8 + $0x28] sm:$0xff]
    %v367 = vld [vmem:[#allocation8 + $0x30] sm:$0xff]
    %v368 = vld [vmem:[#allocation8 + $0x38] sm:$0xff]
    %v369 = vld [vmem:[#allocation8 + $0x40] sm:$0xff]
    %v370 = vld [vmem:[#allocation8 + $0x48] sm:$0xff]
    %v371 = vld [vmem:[#allocation8 + $0x50] sm:$0xff]
    %v372 = vld [vmem:[#allocation8 + $0x58] sm:$0xff]
    %v373 = vld [vmem:[#allocation8 + $0x60] sm:$0xff]
    %v374 = vld [vmem:[#allocation8 + $0x68] sm:$0xff]
    %v375 = vld [vmem:[#allocation8 + $0x70] sm:$0xff]
    %v376 = vld [vmem:[#allocation8 + $0x78] sm:$0xff]
    %v377 = vld [vmem:[%s5] sm:$0x1]
    %v379 = vlaneseq
    %v380 = vshrl.u32 %v379, 7
    %v381 = vsub.s32 0, %v380
    %v382 = vrot.slane %v377, %v381
    %384 = vmatprep.subr.mxu0 0.0
    %385 = vmatpush1.msra.mxu0 %v361
    %386 = vmatprep.subr.mxu0 0.0
    %387 = vmatpush1.msra.mxu0 %v362
    %388 = vmatprep.subr.mxu0 0.0
    %389 = vmatpush1.msra.mxu0 %v363
    %390 = vmatprep.subr.mxu0 0.0
    %391 = vmatpush1.msra.mxu0 %v364
    %392 = vmatprep.subr.mxu0 0.0
    %393 = vmatpush1.msra.mxu0 %v365
    %394 = vmatprep.subr.mxu0 0.0
    %395 = vmatpush1.msra.mxu0 %v366
    %396 = vmatprep.subr.mxu0 0.0
    %397 = vmatpush1.msra.mxu0 %v367
    %398 = vmatprep.subr.mxu0 0.0
    %399 = vmatpush1.msra.mxu0 %v368
    %400 = vmatprep.subr.mxu0 0.0
    %401 = vmatpush1.msra.mxu0 %v369
    %402 = vmatprep.subr.mxu0 0.0
    %403 = vmatpush1.msra.mxu0 %v370
    %404 = vmatprep.subr.mxu0 0.0
    %405 = vmatpush1.msra.mxu0 %v371
    %406 = vmatprep.subr.mxu0 0.0
    %407 = vmatpush1.msra.mxu0 %v372
    %408 = vmatprep.subr.mxu0 0.0
    %409 = vmatpush1.msra.mxu0 %v373
    %410 = vmatprep.subr.mxu0 0.0
    %411 = vmatpush1.msra.mxu0 %v374
    %412 = vmatprep.subr.mxu0 0.0
    %413 = vmatpush1.msra.mxu0 %v375
    %414 = vmatprep.subr.mxu0 0.0
    %415 = vmatpush1.msra.mxu0 %v376
    %416 = vmatprep.subr.mxu0 0.0
    %417 = vmatpush1.msra.mxu0 0.0
    %418 = vmatprep.subr.mxu0 0.0
    %419 = vmatpush1.msra.mxu0 0.0
    %420 = vmatprep.subr.mxu0 0.0
    %421 = vmatpush1.msra.mxu0 0.0
    %422 = vmatprep.subr.mxu0 0.0
    %423 = vmatpush1.msra.mxu0 0.0
    %424 = vmatprep.subr.mxu0 0.0
    %425 = vmatpush1.msra.mxu0 0.0
    %426 = vmatprep.subr.mxu0 0.0
    %427 = vmatpush1.msra.mxu0 0.0
    %428 = vmatprep.subr.mxu0 0.0
    %429 = vmatpush1.msra.mxu0 0.0
    %430 = vmatprep.subr.mxu0 0.0
    %431 = vmatpush1.msra.mxu0 0.0
    %432 = vmatprep.subr.mxu0 0.0
    %433 = vmatpush1.msra.mxu0 0.0
    %434 = vmatprep.subr.mxu0 0.0
    %435 = vmatpush1.msra.mxu0 0.0
    %436 = vmatprep.subr.mxu0 0.0
    %437 = vmatpush1.msra.mxu0 0.0
    %438 = vmatprep.subr.mxu0 0.0
    %439 = vmatpush1.msra.mxu0 0.0
    %440 = vmatprep.subr.mxu0 0.0
    %441 = vmatpush1.msra.mxu0 0.0
    %442 = vmatprep.subr.mxu0 0.0
    %443 = vmatpush1.msra.mxu0 0.0
    %444 = vmatprep.subr.mxu0 0.0
    %445 = vmatpush1.msra.mxu0 0.0
    %446 = vmatprep.subr.mxu0 0.0
    %447 = vmatpush1.msra.mxu0 0.0
    %448 = vmatprep.mubr.f32.mxu0 0.0
    %449 = vmatmul.mubr.f32.gmra.mrb[0].mxu0 %v360
    %v450 = vpop.f32.mrb[0].mxu0
    %v451 = vadd.f32 %v382, %v450
    %v452 = vpop.f32.mrb[0].mxu0
    %453 = vdwg.mxu0
    %v454 = vtanh.pop %v451
    %455 = vst [vmem:[#allocation10] sm:$0xff] %v454
    // Predicated region
    $region42: #{tpu_custom_call.1} parent=1 // pred_check
      _
    $region43: #{tpu_custom_call.1} parent=1 // pred_check_branch
      %457 = sbr.rel (0) target = $region45
    $region44: #{tpu_custom_call.1} parent=1 // pred_region
      %s459 = ssub.s32 128, 128
      %460 = vsyncadd [#allocation4], %s459
      %s462 = sshll.u32 [#allocation10], 4
      %s463 = int_to_ptr.vmem [resolvable:$true] %s462
      %465 = dma.vmem_to_hbm [thread:$0]  %s463, 128, %s6, [#allocation4]
    $region45: #{tpu_custom_call.1} parent=1 // pred_fallthru
      _
    // Predicated region
    $region46: #{tpu_custom_call.1} parent=1 // pred_check
      _
    $region47: #{tpu_custom_call.1} parent=1 // pred_check_branch
      %467 = sbr.rel (0) target = $region49
    $region48: #{tpu_custom_call.1} parent=1 // pred_region
      %468 = dma.done [#allocation4], 128
    $region49: #{tpu_custom_call.1} parent=1 // pred_fallthru
      _
    %469 = vsyncpa [#allocation3], 1
    %470 = vsyncpa [#allocation6], 1
    %471 = vsyncpa [#allocation9], 1
    %472 = vsyncpa [#allocation4], 1

</llo_original>
